<compile_context>
chip_gen: v7x
topology: tpu7x:2x2x1
jax: 0.10.0
libtpu: 0.0.40
codegen_flags: <defaults>
</compile_context>

<pallas_src>
import functools

import jax
import jax.numpy as jnp
from jax.experimental import pallas as pl
from jax.experimental.pallas import tpu as pltpu


def _cdiv(a, b):
    return -(-a // b)


def _round_up(a, b):
    return _cdiv(a, b) * b


# ------------------------------- kernel math ---------------------------------

def _packed_focal(x_raw, tgt, alpha_row, *, gamma, k, c, use_alpha):
    """Focal loss for a lane-packed block.

    x_raw:     (tm, k*c) logits -- k samples packed along the lane axis.
    tgt:       (tm, k)   int32 class ids.
    alpha_row: (1, k*c)  per-class alpha tiled k times, or None.
    Returns (tm, k) float32 per-sample focal losses.
    """
    x = x_raw.astype(jnp.float32)
    tm, L = x.shape
    lane = jax.lax.broadcasted_iota(jnp.int32, (tm, L), 1)

    # Static per-segment lane masks: segment s owns lanes [s*c, (s+1)*c).
    segs = [(lane >= s * c) & (lane < (s + 1) * c) for s in range(k)]

    # One-hot of each sample's target class inside its own lane segment.
    onehot = jnp.zeros((tm, L), jnp.bool_)
    for s in range(k):
        onehot = onehot | (segs[s] & (lane == tgt[:, s:s + 1] + s * c))

    # Segmented max, broadcast back per lane, so exp() runs once on the dense block.
    m_cols = []
    m_seg = jnp.zeros((tm, L), jnp.float32)
    for s in range(k):
        m_s = jnp.max(jnp.where(segs[s], x, -jnp.inf), axis=-1, keepdims=True)
        m_cols.append(m_s)
        m_seg = jnp.where(segs[s], m_s, m_seg)
    e = jnp.exp(x - m_seg)                                   # single dense EUP pass
    xt = jnp.where(onehot, x, 0.0)

    # Per-sample (tm, k) stats via masked lane reductions.
    col = jax.lax.broadcasted_iota(jnp.int32, (tm, k), 1)
    m_k = jnp.zeros((tm, k), jnp.float32)
    se_k = jnp.zeros((tm, k), jnp.float32)
    lt_k = jnp.zeros((tm, k), jnp.float32)
    for s in range(k):
        se_s = jnp.sum(jnp.where(segs[s], e, 0.0), axis=-1, keepdims=True)
        lt_s = jnp.sum(jnp.where(segs[s], xt, 0.0), axis=-1, keepdims=True)
        sel = col == s
        m_k = jnp.where(sel, m_cols[s], m_k)
        se_k = jnp.where(sel, se_s, se_k)
        lt_k = jnp.where(sel, lt_s, lt_k)

    ce = m_k + jnp.log(se_k) - lt_k                          # stable cross-entropy
    pt = jnp.exp(-ce)
    omp = jnp.maximum(1.0 - pt, 0.0)                         # clamp fp noise (pt can exceed 1 by eps)
    g_int = int(gamma)
    if float(g_int) == float(gamma) and g_int >= 0:          # exact small-int gamma: repeated multiply
        w = jnp.ones_like(omp)
        for _ in range(g_int):
            w = w * omp
    else:
        w = jnp.power(omp, jnp.float32(gamma))
    fl = w * ce

    if use_alpha:
        a_sel = jnp.where(onehot, alpha_row.astype(jnp.float32), 0.0)   # (tm, L)
        a_k = jnp.zeros((tm, k), jnp.float32)
        for s in range(k):
            a_s = jnp.sum(jnp.where(segs[s], a_sel, 0.0), axis=-1, keepdims=True)
            a_k = jnp.where(col == s, a_s, a_k)
        fl = a_k * fl
    return fl


# ------------------------------- kernel bodies --------------------------------

def _focal_reduce_kernel(*refs, gamma, k, c, use_alpha, n_valid, tm):
    """mean/sum: grid = (n_split, steps).  Each leading-axis slot builds one partial
    sum in a resident VMEM scratch; the reduce + store happen once in the final step."""
    if use_alpha:
        logits_ref, tgt_ref, alpha_ref, out_ref, acc_ref = refs
    else:
        logits_ref, tgt_ref, out_ref, acc_ref = refs
        alpha_ref = None
    j = pl.program_id(1)

    @pl.when(j == 0)
    def _():
        acc_ref[...] = jnp.zeros_like(acc_ref)

    fl = _packed_focal(logits_ref[...], tgt_ref[...],
                       alpha_ref[...] if use_alpha else None,
                       gamma=gamma, k=k, c=c, use_alpha=use_alpha)

    # Zero out contributions from padded samples in the ragged tail.
    blk = pl.program_id(0) * pl.num_programs(1) + j
    row = jax.lax.broadcasted_iota(jnp.int32, fl.shape, 0)
    col = jax.lax.broadcasted_iota(jnp.int32, fl.shape, 1)
    fl = jnp.where((blk * tm + row) * k + col < n_valid, fl, 0.0)

    acc_ref[...] += fl                                       # elementwise; defer the reduce

    @pl.when(j == pl.num_programs(1) - 1)
    def _():
        total = jnp.sum(acc_ref[...])
        out_ref[...] = jnp.broadcast_to(total, out_ref.shape)


def _focal_rows_kernel(*refs, gamma, k, c, use_alpha):
    """reduction='none': per-sample losses, one (tm, k) block per grid step."""
    if use_alpha:
        logits_ref, tgt_ref, alpha_ref, out_ref = refs
    else:
        logits_ref, tgt_ref, out_ref = refs
        alpha_ref = None
    out_ref[...] = _packed_focal(logits_ref[...], tgt_ref[...],
                                 alpha_ref[...] if use_alpha else None,
                                 gamma=gamma, k=k, c=c, use_alpha=use_alpha)


# --------------------------------- wrapper ------------------------------------

def focal_loss(inputs, targets, *, gamma=2.0, alpha=None, reduction="mean",
               block_bytes=1 << 20, max_pack=8, n_split=2,
               vmem_limit_bytes=32 * 1024 * 1024):
    """Pallas TPU FocalLoss forward.  inputs: (N, C) logits, targets: (N,) ints."""
    n, c = inputs.shape
    elem = jnp.dtype(inputs.dtype).itemsize
    # Lane packing: k samples side by side on the 128-lane axis.
    k = 1 if c >= 128 else max(1, min(128 // c, max_pack))
    L = k * c
    row_align = 8 * max(1, 4 // elem)                        # sublane tile for the input dtype
    r_needed = _cdiv(n, k)                                   # packed rows holding all N samples
    tm = (block_bytes // (elem * L)) // row_align * row_align
    tm = max(row_align, min(tm, _round_up(r_needed, row_align)))

    use_alpha = alpha is not None
    if reduction in ("mean", "sum"):
        steps = _round_up(_cdiv(r_needed, tm), n_split)
        num_j = steps // n_split
    elif reduction == "none":
        steps = _cdiv(r_needed, tm)
        num_j = steps
    else:
        raise ValueError(f"unknown reduction: {reduction}")

    r = steps * tm
    n_pad = r * k
    x = inputs
    t = targets.astype(jnp.int32)
    if n_pad != n:
        # TODO(synk): padding copies the logits once; callers with N % (tm*k) == 0 avoid it.
        x = jnp.pad(x, ((0, n_pad - n), (0, 0)))
        t = jnp.pad(t, ((0, n_pad - n),))
    xp = x.reshape(r, L)                                     # row-major reshape == lane packing
    tp = t.reshape(r, k)

    args = [xp, tp]
    if use_alpha:
        ap = jnp.tile(jnp.asarray(alpha, jnp.float32).reshape(1, c), (1, k))   # (1, L)
    cost = pl.CostEstimate(
        flops=int(12 * n_pad * c),
        transcendentals=int(n_pad * c + 3 * n_pad),
        bytes_accessed=int(elem * n_pad * c + 4 * n_pad + 4 * n_pad))

    if reduction in ("mean", "sum"):
        in_specs = [pl.BlockSpec((tm, L), lambda s, j: (s * num_j + j, 0)),
                    pl.BlockSpec((tm, k), lambda s, j: (s * num_j + j, 0))]
        if use_alpha:
            in_specs.append(pl.BlockSpec((1, L), lambda s, j: (0, 0)))
            args.append(ap)
        kern = functools.partial(_focal_reduce_kernel, gamma=gamma, k=k, c=c,
                                 use_alpha=use_alpha, n_valid=n, tm=tm)
        out = pl.pallas_call(
            kern,
            out_shape=jax.ShapeDtypeStruct((n_split * 8, 128), jnp.float32),
            grid=(n_split, num_j),
            in_specs=in_specs,
            out_specs=pl.BlockSpec((8, 128), lambda s, j: (s, 0)),
            scratch_shapes=[pltpu.VMEM((tm, k), jnp.float32)],
            compiler_params=pltpu.CompilerParams(
                dimension_semantics=("parallel", "arbitrary"),
                vmem_limit_bytes=vmem_limit_bytes),
            cost_estimate=cost,
        )(*args)
        total = out.reshape(n_split, -1)[:, 0].sum()         # combine per-core partials
        if reduction == "mean":
            total = total / jnp.float32(n)
        return total

    # reduction == "none"
    in_specs = [pl.BlockSpec((tm, L), lambda i: (i, 0)),
                pl.BlockSpec((tm, k), lambda i: (i, 0))]
    if use_alpha:
        in_specs.append(pl.BlockSpec((1, L), lambda i: (0, 0)))
        args.append(ap)
    kern = functools.partial(_focal_rows_kernel, gamma=gamma, k=k, c=c,
                             use_alpha=use_alpha)
    out = pl.pallas_call(
        kern,
        out_shape=jax.ShapeDtypeStruct((r, k), jnp.float32),
        grid=(steps,),
        in_specs=in_specs,
        out_specs=pl.BlockSpec((tm, k), lambda i: (i, 0)),
        compiler_params=pltpu.CompilerParams(
            dimension_semantics=("parallel",),
            vmem_limit_bytes=vmem_limit_bytes),
        cost_estimate=cost,
    )(*args)
    return out.reshape(n_pad)[:n]


# -------------------------------- reference -----------------------------------

def ref_focal_loss(logits, targets, *, gamma=2.0, alpha=None, reduction="mean"):
    """Pure-JAX reference matching F.cross_entropy-based FocalLoss.forward."""
    x = logits.astype(jnp.float32)
    lse = jax.nn.logsumexp(x, axis=-1)
    tgt = targets.astype(jnp.int32)
    ce = lse - jnp.take_along_axis(x, tgt[:, None], axis=-1)[:, 0]
    pt = jnp.exp(-ce)
    omp = jnp.maximum(1.0 - pt, 0.0)          # fp-noise guard only (matches kernel clamp)
    fl = omp ** gamma * ce
    if alpha is not None:
        fl = alpha[tgt] * fl
    if reduction == "mean":
        return fl.mean()
    if reduction == "sum":
        return fl.sum()
    return fl


# ----------------------------------- main --------------------------------------

if __name__ == "__main__":
    key = jax.random.PRNGKey(0)
    k1, k2, k3 = jax.random.split(key, 3)

    N, C = 250, 32                 # ragged N on purpose: exercises pad + in-kernel masking
    logits = 2.0 * jax.random.normal(k1, (N, C), jnp.float32)
    targets = jax.random.randint(k2, (N,), 0, C, jnp.int32)
    alpha = jax.random.uniform(k3, (C,), jnp.float32, minval=0.25, maxval=1.0)

    cases = [(red, a, 2.0) for red in ("mean", "sum", "none") for a in (None, alpha)]
    cases.append(("mean", alpha, 1.5))        # non-integer gamma path (clamped power)

    errs = []
    for reduction, a, g in cases:
        got = jax.block_until_ready(
            focal_loss(logits, targets, gamma=g, alpha=a, reduction=reduction,
                       block_bytes=8192))     # small tiles in the test -> multi-step grid
        want = ref_focal_loss(logits, targets, gamma=g, alpha=a, reduction=reduction)
        errs.append(float(jnp.max(jnp.abs(got - want) / (1.0 + jnp.abs(want)))))

    if max(errs) < 1e-4:
        print("KERNEL_OK")
    else:
        print(f"MISMATCH rel_errs={errs}")
</pallas_src>

<mosaic_0001>
module attributes {stable_mosaic.version = 11 : i64} {
  func.func @_focal_reduce_kernel(%arg0: i32, %arg1: i32, %arg2: memref<16x128xf32, #tpu.memory_space<vmem>>, %arg3: memref<16x4xi32, #tpu.memory_space<vmem>>, %arg4: memref<8x128xf32, #tpu.memory_space<vmem>>, %arg5: memref<16x4xf32, #tpu.memory_space<vmem>>) attributes {dimension_semantics = [#tpu.dimension_semantics<parallel>, #tpu.dimension_semantics<arbitrary>], iteration_bounds = array<i64: 2, 2>, scalar_prefetch = 0 : i64, scratch_operands = 1 : i64, tpu.core_type = #tpu.core_type<tc>, window_params = [{transform_indices = @transform_0, window_bounds = array<i64: 16, 128>}, {transform_indices = @transform_1, window_bounds = array<i64: 16, 4>}, {transform_indices = @transform_2, window_bounds = array<i64: 8, 128>}]} {
    %c0_i32 = arith.constant 0 : i32
    %0 = arith.cmpi eq, %arg1, %c0_i32 : i32
    %1 = arith.extui %0 : i1 to i32
    %c0_i32_0 = arith.constant 0 : i32
    %2 = arith.cmpi ne, %1, %c0_i32_0 : i32
    scf.if %2 {
      %cst_53 = arith.constant 0.000000e+00 : f32
      %202 = vector.broadcast %cst_53 : f32 to vector<16x4xf32>
      %c0_54 = arith.constant 0 : index
      %c0_55 = arith.constant 0 : index
      %203 = vector.load %arg5[%c0_54, %c0_55] : memref<16x4xf32, #tpu.memory_space<vmem>>, vector<16x4xf32>
      tpu.vector_store %arg5[%c0_54, %c0_55], %202 {strides = array<i32>} : memref<16x4xf32, #tpu.memory_space<vmem>>, vector<16x4xf32>,
    } else {
    }
    %c0 = arith.constant 0 : index
    %c0_1 = arith.constant 0 : index
    %3 = vector.load %arg2[%c0, %c0_1] : memref<16x128xf32, #tpu.memory_space<vmem>>, vector<16x128xf32>
    %c0_2 = arith.constant 0 : index
    %c0_3 = arith.constant 0 : index
    %4 = vector.load %arg3[%c0_2, %c0_3] : memref<16x4xi32, #tpu.memory_space<vmem>>, vector<16x4xi32>
    %5 = tpu.iota {dimensions = array<i32: 1>} : vector<16x128xi32>
    %c0_i32_4 = arith.constant 0 : i32
    %6 = vector.broadcast %c0_i32_4 : i32 to vector<16x128xi32>
    %7 = arith.cmpi sge, %5, %6 : vector<16x128xi32>
    %c32_i32 = arith.constant 32 : i32
    %8 = vector.broadcast %c32_i32 : i32 to vector<16x128xi32>
    %9 = arith.cmpi slt, %5, %8 : vector<16x128xi32>
    %10 = arith.andi %7, %9 : vector<16x128xi1>
    %c32_i32_5 = arith.constant 32 : i32
    %11 = vector.broadcast %c32_i32_5 : i32 to vector<16x128xi32>
    %12 = arith.cmpi sge, %5, %11 : vector<16x128xi32>
    %c64_i32 = arith.constant 64 : i32
    %13 = vector.broadcast %c64_i32 : i32 to vector<16x128xi32>
    %14 = arith.cmpi slt, %5, %13 : vector<16x128xi32>
    %15 = arith.andi %12, %14 : vector<16x128xi1>
    %c64_i32_6 = arith.constant 64 : i32
    %16 = vector.broadcast %c64_i32_6 : i32 to vector<16x128xi32>
    %17 = arith.cmpi sge, %5, %16 : vector<16x128xi32>
    %c96_i32 = arith.constant 96 : i32
    %18 = vector.broadcast %c96_i32 : i32 to vector<16x128xi32>
    %19 = arith.cmpi slt, %5, %18 : vector<16x128xi32>
    %20 = arith.andi %17, %19 : vector<16x128xi1>
    %c96_i32_7 = arith.constant 96 : i32
    %21 = vector.broadcast %c96_i32_7 : i32 to vector<16x128xi32>
    %22 = arith.cmpi sge, %5, %21 : vector<16x128xi32>
    %c128_i32 = arith.constant 128 : i32
    %23 = vector.broadcast %c128_i32 : i32 to vector<16x128xi32>
    %24 = arith.cmpi slt, %5, %23 : vector<16x128xi32>
    %25 = arith.andi %22, %24 : vector<16x128xi1>
    %false = arith.constant false
    %26 = vector.broadcast %false : i1 to vector<16x128xi1>
    %27 = vector.extract_strided_slice %4 {offsets = [0, 0], sizes = [16, 1], strides = [1, 1]} : vector<16x4xi32> to vector<16x1xi32>
    %c0_i32_8 = arith.constant 0 : i32
    %28 = vector.broadcast %c0_i32_8 : i32 to vector<16x1xi32>
    %29 = arith.addi %27, %28 : vector<16x1xi32>
    %30 = vector.broadcast %29 : vector<16x1xi32> to vector<16x128xi32>
    %31 = arith.cmpi eq, %5, %30 : vector<16x128xi32>
    %32 = arith.andi %10, %31 : vector<16x128xi1>
    %33 = arith.ori %26, %32 : vector<16x128xi1>
    %34 = vector.extract_strided_slice %4 {offsets = [0, 1], sizes = [16, 1], strides = [1, 1]} : vector<16x4xi32> to vector<16x1xi32>
    %c32_i32_9 = arith.constant 32 : i32
    %35 = vector.broadcast %c32_i32_9 : i32 to vector<16x1xi32>
    %36 = arith.addi %34, %35 : vector<16x1xi32>
    %37 = vector.broadcast %36 : vector<16x1xi32> to vector<16x128xi32>
    %38 = arith.cmpi eq, %5, %37 : vector<16x128xi32>
    %39 = arith.andi %15, %38 : vector<16x128xi1>
    %40 = arith.ori %33, %39 : vector<16x128xi1>
    %41 = vector.extract_strided_slice %4 {offsets = [0, 2], sizes = [16, 1], strides = [1, 1]} : vector<16x4xi32> to vector<16x1xi32>
    %c64_i32_10 = arith.constant 64 : i32
    %42 = vector.broadcast %c64_i32_10 : i32 to vector<16x1xi32>
    %43 = arith.addi %41, %42 : vector<16x1xi32>
    %44 = vector.broadcast %43 : vector<16x1xi32> to vector<16x128xi32>
    %45 = arith.cmpi eq, %5, %44 : vector<16x128xi32>
    %46 = arith.andi %20, %45 : vector<16x128xi1>
    %47 = arith.ori %40, %46 : vector<16x128xi1>
    %48 = vector.extract_strided_slice %4 {offsets = [0, 3], sizes = [16, 1], strides = [1, 1]} : vector<16x4xi32> to vector<16x1xi32>
    %c96_i32_11 = arith.constant 96 : i32
    %49 = vector.broadcast %c96_i32_11 : i32 to vector<16x1xi32>
    %50 = arith.addi %48, %49 : vector<16x1xi32>
    %51 = vector.broadcast %50 : vector<16x1xi32> to vector<16x128xi32>
    %52 = arith.cmpi eq, %5, %51 : vector<16x128xi32>
    %53 = arith.andi %25, %52 : vector<16x128xi1>
    %54 = arith.ori %47, %53 : vector<16x128xi1>
    %cst = arith.constant 0.000000e+00 : f32
    %55 = vector.broadcast %cst : f32 to vector<16x128xf32>
    %cst_12 = arith.constant 0xFF800000 : f32
    %56 = vector.broadcast %cst_12 : f32 to vector<16x128xf32>
    %57 = arith.select %10, %3, %56 : vector<16x128xi1>, vector<16x128xf32>
    %cst_13 = arith.constant dense<0xFF800000> : vector<16xf32>
    %58 = vector.multi_reduction <maximumf>, %57, %cst_13 [1] : vector<16x128xf32> to vector<16xf32>
    %59 = vector.shape_cast %58 : vector<16xf32> to vector<16x1xf32>
    %60 = vector.shape_cast %59 : vector<16x1xf32> to vector<16x1xf32>
    %61 = vector.broadcast %60 : vector<16x1xf32> to vector<16x128xf32>
    %62 = arith.select %10, %61, %55 : vector<16x128xi1>, vector<16x128xf32>
    %cst_14 = arith.constant 0xFF800000 : f32
    %63 = vector.broadcast %cst_14 : f32 to vector<16x128xf32>
    %64 = arith.select %15, %3, %63 : vector<16x128xi1>, vector<16x128xf32>
    %cst_15 = arith.constant dense<0xFF800000> : vector<16xf32>
    %65 = vector.multi_reduction <maximumf>, %64, %cst_15 [1] : vector<16x128xf32> to vector<16xf32>
    %66 = vector.shape_cast %65 : vector<16xf32> to vector<16x1xf32>
    %67 = vector.shape_cast %66 : vector<16x1xf32> to vector<16x1xf32>
    %68 = vector.broadcast %67 : vector<16x1xf32> to vector<16x128xf32>
    %69 = arith.select %15, %68, %62 : vector<16x128xi1>, vector<16x128xf32>
    %cst_16 = arith.constant 0xFF800000 : f32
    %70 = vector.broadcast %cst_16 : f32 to vector<16x128xf32>
    %71 = arith.select %20, %3, %70 : vector<16x128xi1>, vector<16x128xf32>
    %cst_17 = arith.constant dense<0xFF800000> : vector<16xf32>
    %72 = vector.multi_reduction <maximumf>, %71, %cst_17 [1] : vector<16x128xf32> to vector<16xf32>
    %73 = vector.shape_cast %72 : vector<16xf32> to vector<16x1xf32>
    %74 = vector.shape_cast %73 : vector<16x1xf32> to vector<16x1xf32>
    %75 = vector.broadcast %74 : vector<16x1xf32> to vector<16x128xf32>
    %76 = arith.select %20, %75, %69 : vector<16x128xi1>, vector<16x128xf32>
    %cst_18 = arith.constant 0xFF800000 : f32
    %77 = vector.broadcast %cst_18 : f32 to vector<16x128xf32>
    %78 = arith.select %25, %3, %77 : vector<16x128xi1>, vector<16x128xf32>
    %cst_19 = arith.constant dense<0xFF800000> : vector<16xf32>
    %79 = vector.multi_reduction <maximumf>, %78, %cst_19 [1] : vector<16x128xf32> to vector<16xf32>
    %80 = vector.shape_cast %79 : vector<16xf32> to vector<16x1xf32>
    %81 = vector.shape_cast %80 : vector<16x1xf32> to vector<16x1xf32>
    %82 = vector.broadcast %81 : vector<16x1xf32> to vector<16x128xf32>
    %83 = arith.select %25, %82, %76 : vector<16x128xi1>, vector<16x128xf32>
    %84 = arith.subf %3, %83 : vector<16x128xf32>
    %85 = math.exp %84 : vector<16x128xf32>
    %cst_20 = arith.constant 0.000000e+00 : f32
    %86 = vector.broadcast %cst_20 : f32 to vector<16x128xf32>
    %87 = arith.select %54, %3, %86 : vector<16x128xi1>, vector<16x128xf32>
    %88 = tpu.iota {dimensions = array<i32: 1>} : vector<16x4xi32>
    %cst_21 = arith.constant 0.000000e+00 : f32
    %89 = vector.broadcast %cst_21 : f32 to vector<16x4xf32>
    %cst_22 = arith.constant 0.000000e+00 : f32
    %90 = vector.broadcast %cst_22 : f32 to vector<16x4xf32>
    %cst_23 = arith.constant 0.000000e+00 : f32
    %91 = vector.broadcast %cst_23 : f32 to vector<16x4xf32>
    %cst_24 = arith.constant 0.000000e+00 : f32
    %92 = vector.broadcast %cst_24 : f32 to vector<16x128xf32>
    %93 = arith.select %10, %85, %92 : vector<16x128xi1>, vector<16x128xf32>
    %cst_25 = arith.constant dense<0.000000e+00> : vector<16xf32>
    %94 = vector.multi_reduction <add>, %93, %cst_25 [1] : vector<16x128xf32> to vector<16xf32>
    %95 = vector.shape_cast %94 : vector<16xf32> to vector<16x1xf32>
    %cst_26 = arith.constant 0.000000e+00 : f32
    %96 = vector.broadcast %cst_26 : f32 to vector<16x128xf32>
    %97 = arith.select %10, %87, %96 : vector<16x128xi1>, vector<16x128xf32>
    %cst_27 = arith.constant dense<0.000000e+00> : vector<16xf32>
    %98 = vector.multi_reduction <add>, %97, %cst_27 [1] : vector<16x128xf32> to vector<16xf32>
    %99 = vector.shape_cast %98 : vector<16xf32> to vector<16x1xf32>
    %c0_i32_28 = arith.constant 0 : i32
    %100 = vector.broadcast %c0_i32_28 : i32 to vector<16x4xi32>
    %101 = arith.cmpi eq, %88, %100 : vector<16x4xi32>
    %102 = vector.shape_cast %59 : vector<16x1xf32> to vector<16x1xf32>
    %103 = vector.broadcast %102 : vector<16x1xf32> to vector<16x4xf32>
    %104 = arith.select %101, %103, %89 : vector<16x4xi1>, vector<16x4xf32>
    %105 = vector.shape_cast %95 : vector<16x1xf32> to vector<16x1xf32>
    %106 = vector.broadcast %105 : vector<16x1xf32> to vector<16x4xf32>
    %107 = arith.select %101, %106, %90 : vector<16x4xi1>, vector<16x4xf32>
    %108 = vector.shape_cast %99 : vector<16x1xf32> to vector<16x1xf32>
    %109 = vector.broadcast %108 : vector<16x1xf32> to vector<16x4xf32>
    %110 = arith.select %101, %109, %91 : vector<16x4xi1>, vector<16x4xf32>
    %cst_29 = arith.constant 0.000000e+00 : f32
    %111 = vector.broadcast %cst_29 : f32 to vector<16x128xf32>
    %112 = arith.select %15, %85, %111 : vector<16x128xi1>, vector<16x128xf32>
    %cst_30 = arith.constant dense<0.000000e+00> : vector<16xf32>
    %113 = vector.multi_reduction <add>, %112, %cst_30 [1] : vector<16x128xf32> to vector<16xf32>
    %114 = vector.shape_cast %113 : vector<16xf32> to vector<16x1xf32>
    %cst_31 = arith.constant 0.000000e+00 : f32
    %115 = vector.broadcast %cst_31 : f32 to vector<16x128xf32>
    %116 = arith.select %15, %87, %115 : vector<16x128xi1>, vector<16x128xf32>
    %cst_32 = arith.constant dense<0.000000e+00> : vector<16xf32>
    %117 = vector.multi_reduction <add>, %116, %cst_32 [1] : vector<16x128xf32> to vector<16xf32>
    %118 = vector.shape_cast %117 : vector<16xf32> to vector<16x1xf32>
    %c1_i32 = arith.constant 1 : i32
    %119 = vector.broadcast %c1_i32 : i32 to vector<16x4xi32>
    %120 = arith.cmpi eq, %88, %119 : vector<16x4xi32>
    %121 = vector.shape_cast %66 : vector<16x1xf32> to vector<16x1xf32>
    %122 = vector.broadcast %121 : vector<16x1xf32> to vector<16x4xf32>
    %123 = arith.select %120, %122, %104 : vector<16x4xi1>, vector<16x4xf32>
    %124 = vector.shape_cast %114 : vector<16x1xf32> to vector<16x1xf32>
    %125 = vector.broadcast %124 : vector<16x1xf32> to vector<16x4xf32>
    %126 = arith.select %120, %125, %107 : vector<16x4xi1>, vector<16x4xf32>
    %127 = vector.shape_cast %118 : vector<16x1xf32> to vector<16x1xf32>
    %128 = vector.broadcast %127 : vector<16x1xf32> to vector<16x4xf32>
    %129 = arith.select %120, %128, %110 : vector<16x4xi1>, vector<16x4xf32>
    %cst_33 = arith.constant 0.000000e+00 : f32
    %130 = vector.broadcast %cst_33 : f32 to vector<16x128xf32>
    %131 = arith.select %20, %85, %130 : vector<16x128xi1>, vector<16x128xf32>
    %cst_34 = arith.constant dense<0.000000e+00> : vector<16xf32>
    %132 = vector.multi_reduction <add>, %131, %cst_34 [1] : vector<16x128xf32> to vector<16xf32>
    %133 = vector.shape_cast %132 : vector<16xf32> to vector<16x1xf32>
    %cst_35 = arith.constant 0.000000e+00 : f32
    %134 = vector.broadcast %cst_35 : f32 to vector<16x128xf32>
    %135 = arith.select %20, %87, %134 : vector<16x128xi1>, vector<16x128xf32>
    %cst_36 = arith.constant dense<0.000000e+00> : vector<16xf32>
    %136 = vector.multi_reduction <add>, %135, %cst_36 [1] : vector<16x128xf32> to vector<16xf32>
    %137 = vector.shape_cast %136 : vector<16xf32> to vector<16x1xf32>
    %c2_i32 = arith.constant 2 : i32
    %138 = vector.broadcast %c2_i32 : i32 to vector<16x4xi32>
    %139 = arith.cmpi eq, %88, %138 : vector<16x4xi32>
    %140 = vector.shape_cast %73 : vector<16x1xf32> to vector<16x1xf32>
    %141 = vector.broadcast %140 : vector<16x1xf32> to vector<16x4xf32>
    %142 = arith.select %139, %141, %123 : vector<16x4xi1>, vector<16x4xf32>
    %143 = vector.shape_cast %133 : vector<16x1xf32> to vector<16x1xf32>
    %144 = vector.broadcast %143 : vector<16x1xf32> to vector<16x4xf32>
    %145 = arith.select %139, %144, %126 : vector<16x4xi1>, vector<16x4xf32>
    %146 = vector.shape_cast %137 : vector<16x1xf32> to vector<16x1xf32>
    %147 = vector.broadcast %146 : vector<16x1xf32> to vector<16x4xf32>
    %148 = arith.select %139, %147, %129 : vector<16x4xi1>, vector<16x4xf32>
    %cst_37 = arith.constant 0.000000e+00 : f32
    %149 = vector.broadcast %cst_37 : f32 to vector<16x128xf32>
    %150 = arith.select %25, %85, %149 : vector<16x128xi1>, vector<16x128xf32>
    %cst_38 = arith.constant dense<0.000000e+00> : vector<16xf32>
    %151 = vector.multi_reduction <add>, %150, %cst_38 [1] : vector<16x128xf32> to vector<16xf32>
    %152 = vector.shape_cast %151 : vector<16xf32> to vector<16x1xf32>
    %cst_39 = arith.constant 0.000000e+00 : f32
    %153 = vector.broadcast %cst_39 : f32 to vector<16x128xf32>
    %154 = arith.select %25, %87, %153 : vector<16x128xi1>, vector<16x128xf32>
    %cst_40 = arith.constant dense<0.000000e+00> : vector<16xf32>
    %155 = vector.multi_reduction <add>, %154, %cst_40 [1] : vector<16x128xf32> to vector<16xf32>
    %156 = vector.shape_cast %155 : vector<16xf32> to vector<16x1xf32>
    %c3_i32 = arith.constant 3 : i32
    %157 = vector.broadcast %c3_i32 : i32 to vector<16x4xi32>
    %158 = arith.cmpi eq, %88, %157 : vector<16x4xi32>
    %159 = vector.shape_cast %80 : vector<16x1xf32> to vector<16x1xf32>
    %160 = vector.broadcast %159 : vector<16x1xf32> to vector<16x4xf32>
    %161 = arith.select %158, %160, %142 : vector<16x4xi1>, vector<16x4xf32>
    %162 = vector.shape_cast %152 : vector<16x1xf32> to vector<16x1xf32>
    %163 = vector.broadcast %162 : vector<16x1xf32> to vector<16x4xf32>
    %164 = arith.select %158, %163, %145 : vector<16x4xi1>, vector<16x4xf32>
    %165 = vector.shape_cast %156 : vector<16x1xf32> to vector<16x1xf32>
    %166 = vector.broadcast %165 : vector<16x1xf32> to vector<16x4xf32>
    %167 = arith.select %158, %166, %148 : vector<16x4xi1>, vector<16x4xf32>
    %168 = math.log %164 : vector<16x4xf32>
    %169 = arith.addf %161, %168 : vector<16x4xf32>
    %170 = arith.subf %169, %167 : vector<16x4xf32>
    %cst_41 = arith.constant 0.000000e+00 : f32
    %171 = vector.broadcast %cst_41 : f32 to vector<16x4xf32>
    %172 = arith.subf %171, %170 : vector<16x4xf32>
    %173 = math.exp %172 : vector<16x4xf32>
    %cst_42 = arith.constant 1.000000e+00 : f32
    %174 = vector.broadcast %cst_42 : f32 to vector<16x4xf32>
    %175 = arith.subf %174, %173 : vector<16x4xf32>
    %cst_43 = arith.constant 0.000000e+00 : f32
    %176 = vector.broadcast %cst_43 : f32 to vector<16x4xf32>
    %177 = arith.maximumf %175, %176 : vector<16x4xf32>
    %cst_44 = arith.constant 1.000000e+00 : f32
    %178 = vector.broadcast %cst_44 : f32 to vector<16x4xf32>
    %179 = arith.mulf %178, %177 : vector<16x4xf32>
    %180 = arith.mulf %179, %177 : vector<16x4xf32>
    %181 = arith.mulf %180, %170 : vector<16x4xf32>
    %c2_i32_45 = arith.constant 2 : i32
    %182 = arith.muli %arg0, %c2_i32_45 : i32
    %183 = arith.addi %182, %arg1 : i32
    %184 = tpu.iota {dimensions = array<i32: 0>} : vector<16x4xi32>
    %185 = tpu.iota {dimensions = array<i32: 1>} : vector<16x4xi32>
    %c16_i32 = arith.constant 16 : i32
    %186 = arith.muli %183, %c16_i32 : i32
    %187 = vector.broadcast %186 : i32 to vector<16x4xi32>
    %188 = arith.addi %187, %184 : vector<16x4xi32>
    %c4_i32 = arith.constant 4 : i32
    %189 = vector.broadcast %c4_i32 : i32 to vector<16x4xi32>
    %190 = arith.muli %188, %189 : vector<16x4xi32>
    %191 = arith.addi %190, %185 : vector<16x4xi32>
    %c250_i32 = arith.constant 250 : i32
    %192 = vector.broadcast %c250_i32 : i32 to vector<16x4xi32>
    %193 = arith.cmpi slt, %191, %192 : vector<16x4xi32>
    %cst_46 = arith.constant 0.000000e+00 : f32
    %194 = vector.broadcast %cst_46 : f32 to vector<16x4xf32>
    %195 = arith.select %193, %181, %194 : vector<16x4xi1>, vector<16x4xf32>
    %c0_47 = arith.constant 0 : index
    %c0_48 = arith.constant 0 : index
    %196 = vector.load %arg5[%c0_47, %c0_48] : memref<16x4xf32, #tpu.memory_space<vmem>>, vector<16x4xf32>
    %197 = arith.addf %196, %195 : vector<16x4xf32>
    %c0_49 = arith.constant 0 : index
    %c0_50 = arith.constant 0 : index
    %198 = vector.load %arg5[%c0_49, %c0_50] : memref<16x4xf32, #tpu.memory_space<vmem>>, vector<16x4xf32>
    tpu.vector_store %arg5[%c0_49, %c0_50], %197 {strides = array<i32>} : memref<16x4xf32, #tpu.memory_space<vmem>>, vector<16x4xf32>,
    %c1_i32_51 = arith.constant 1 : i32
    %199 = arith.cmpi eq, %arg1, %c1_i32_51 : i32
    %200 = arith.extui %199 : i1 to i32
    %c0_i32_52 = arith.constant 0 : i32
    %201 = arith.cmpi ne, %200, %c0_i32_52 : i32
    scf.if %201 {
      %c0_53 = arith.constant 0 : index
      %c0_54 = arith.constant 0 : index
      %202 = vector.load %arg5[%c0_53, %c0_54] : memref<16x4xf32, #tpu.memory_space<vmem>>, vector<16x4xf32>
      %203 = vector.shape_cast %202 : vector<16x4xf32> to vector<1x16x4xf32>
      %cst_55 = arith.constant dense<0.000000e+00> : vector<1xf32>
      %204 = vector.multi_reduction <add>, %203, %cst_55 [1, 2] : vector<1x16x4xf32> to vector<1xf32>
      %205 = vector.shape_cast %204 : vector<1xf32> to vector<1x1x1xf32>
      %206 = vector.extract %205[0, 0, 0] : f32 from vector<1x1x1xf32>
      %207 = vector.broadcast %206 : f32 to vector<8x128xf32>
      %c0_56 = arith.constant 0 : index
      %c0_57 = arith.constant 0 : index
      %208 = vector.load %arg4[%c0_56, %c0_57] : memref<8x128xf32, #tpu.memory_space<vmem>>, vector<8x128xf32>
      tpu.vector_store %arg4[%c0_56, %c0_57], %207 {strides = array<i32>} : memref<8x128xf32, #tpu.memory_space<vmem>>, vector<8x128xf32>,
    } else {
    }
    return
  }
  func.func @transform_0(%arg0: i32, %arg1: i32) -> (i32, i32) {
    %c2_i32 = arith.constant 2 : i32
    %0 = arith.muli %arg0, %c2_i32 : i32
    %1 = arith.addi %0, %arg1 : i32
    %c0_i32 = arith.constant 0 : i32
    %c0_i32_0 = arith.constant 0 : i32
    return %1, %c0_i32 : i32, i32
  }
  func.func @transform_1(%arg0: i32, %arg1: i32) -> (i32, i32) {
    %c2_i32 = arith.constant 2 : i32
    %0 = arith.muli %arg0, %c2_i32 : i32
    %1 = arith.addi %0, %arg1 : i32
    %c0_i32 = arith.constant 0 : i32
    %c0_i32_0 = arith.constant 0 : i32
    return %1, %c0_i32 : i32, i32
  }
  func.func @transform_2(%arg0: i32, %arg1: i32) -> (i32, i32) {
    %c0_i32 = arith.constant 0 : i32
    %c0_i32_0 = arith.constant 0 : i32
    return %arg0, %c0_i32 : i32, i32
  }
}

</mosaic_0001>

<llo_original>
// kernel: tpu_custom_call.1
$region0: #{tpu_custom_call.1}
  #allocation0 [shape = 'u32[]', space=smem, size = 0x4, offset = 0x4, fixed_abs, tag = 'smem constant byte address 0x4 - core index']
  #allocation1 [shape = 'u32[144,128]{1,0:T(1,128)}', space=vmem, size = 0x12000, scoped, tag = 'internal scratch']
  #allocation2 [shape = 'f32[16,4]{1,0:T(8,128)}', space=vmem, size = 0x2000, scoped, tag = 'scratch operand']
  %s0 = inlined_call_operand.vmem [shape: f32[64,128], index: 0, kind: input, shape index: {}]
  %s1 = inlined_call_operand.vmem [shape: s32[64,4], index: 1, kind: input, shape index: {}]
  %s2 = inlined_call_operand.hbm [shape: f32[16,128], index: 2, kind: output, shape index: {}]
  %s3 = sld [smem:[#allocation0]]
  $region49: #{tpu_custom_call.1} parent=0
    _
  %s5 = ssub.s32 1, %s3
  %s6 = scalar_select 0, %s5, %s3
  $region1: #{tpu_custom_call.1} parent=0
    #allocation3 [shape = 'u8[8192]{0}', space=vmem, size = 0x2000, scoped, tag = 'output window, operand 0']
    #allocation4 [shape = 's32[2]{0}', space=sflag, size = 0x8, scoped, tag = 'scoped memory for tpu_custom_call.1']
    %7 = vsyncpa [#allocation4], 0
    %s8 = scalar_lea.sflag [#allocation4], 1
    %9 = vsyncpa %s8, 0
    loop: start=0, step=1, limit=6
    $region2: #{tpu_custom_call.1} parent=1 // loop_pre_header
      _
    $region3: #{tpu_custom_call.1} parent=1 // loop_header
      %s11 = sphi 0, %s15
      %p12 = scmp.ge.s32.totalorder %s11, 6
      %s18 = sphi 0, %s30
      %s19 = sphi 0, %s26
      %s20 = sphi 0, %s18
      %s21 = sphi 0, %s19
      %s22 = sphi 0, %s20
      %s23 = sphi 0, %s21
      %s37 = sphi 0, %s39
      %s40 = sphi 0, %s37
      %s41 = sphi 0, %s40
      %s57 = sphi 0, %s41
      %s67 = sphi 0, %s69
      %s70 = sphi 0, %s67
      %s71 = sphi 0, %s70
      %s87 = sphi 0, %s71
      %s93 = sphi 0, %s95
      %s96 = sphi 0, %s93
      %s97 = sphi 0, %s96
      %s113 = sphi 0, %s97
    $region4: #{tpu_custom_call.1} parent=1 // loop_header_branch
      %14 = sbr.rel (%p12) target = $region8
    $region5: #{tpu_custom_call.1} parent=1 // loop_body
      %s16 = ssub.s32 %s11, 1
      %s17 = ssub.s32 %s11, 2
      %s24 = sadd.s32 1, %s19
      %p25 = scmp.ge.s32.totalorder %s24, 2
      %s26 = scalar_select %p25, 0, %s24
      %s27 = sadd.s32 1, %s18
      %s28 = scalar_select %p25, %s27, %s18
      %p29 = scmp.ge.s32.totalorder %s28, 2
      %s30 = scalar_select %p29, 0, %s28
      %s31 = smul.u32 %s18, 2
      %s32 = sadd.s32 %s31, %s19
      %s33 = smul.u32 %s30, 2
      %s34 = sadd.s32 %s33, %s26
      %s35 = ssub.s32 %s32, %s34
      %p36 = scmp.eq.s32.totalorder %s35, 0
      %s38 = sadd.s32 %s37, 1
      %s39 = scalar_select %p36, %s37, %s38
      %p42 = pneg %p36
      %p43 = scmp.eq.s32.totalorder %s11, 3
      %p44 = por %p42, %p43
      %p45 = scmp.ne.s32.totalorder %s37, %s40
      %p46 = scmp.eq.s32.totalorder %s11, 0
      %p47 = por %p45, %p46
      %p48 = scmp.ne.s32.totalorder %s37, %s40
      %p49 = scmp.eq.s32.totalorder %s16, 3
      %p50 = por %p48, %p49
      %p51 = scmp.ne.s32.totalorder %s40, %s41
      %p52 = scmp.eq.s32.totalorder %s16, 0
      %p53 = por %p51, %p52
      %p54 = scmp.ne.s32.totalorder %s40, %s41
      %p55 = scmp.eq.s32.totalorder %s17, 3
      %p56 = por %p54, %p55
      %p58 = scmp.ne.s32.totalorder %s41, %s57
      %p59 = scmp.eq.s32.totalorder %s17, 0
      %p60 = por %p58, %p59
      %s61 = smul.u32 %s18, 2
      %s62 = sadd.s32 %s61, %s19
      %s63 = smul.u32 %s30, 2
      %s64 = sadd.s32 %s63, %s26
      %s65 = ssub.s32 %s62, %s64
      %p66 = scmp.eq.s32.totalorder %s65, 0
      %s68 = sadd.s32 %s67, 1
      %s69 = scalar_select %p66, %s67, %s68
      %p72 = pneg %p66
      %p73 = scmp.eq.s32.totalorder %s11, 3
      %p74 = por %p72, %p73
      %p75 = scmp.ne.s32.totalorder %s67, %s70
      %p76 = scmp.eq.s32.totalorder %s11, 0
      %p77 = por %p75, %p76
      %p78 = scmp.ne.s32.totalorder %s67, %s70
      %p79 = scmp.eq.s32.totalorder %s16, 3
      %p80 = por %p78, %p79
      %p81 = scmp.ne.s32.totalorder %s70, %s71
      %p82 = scmp.eq.s32.totalorder %s16, 0
      %p83 = por %p81, %p82
      %p84 = scmp.ne.s32.totalorder %s70, %s71
      %p85 = scmp.eq.s32.totalorder %s17, 3
      %p86 = por %p84, %p85
      %p88 = scmp.ne.s32.totalorder %s71, %s87
      %p89 = scmp.eq.s32.totalorder %s17, 0
      %p90 = por %p88, %p89
      %s91 = ssub.s32 %s18, %s30
      %p92 = scmp.eq.s32.totalorder %s91, 0
      %s94 = sadd.s32 %s93, 1
      %s95 = scalar_select %p92, %s93, %s94
      %p98 = pneg %p92
      %p99 = scmp.eq.s32.totalorder %s11, 3
      %p100 = por %p98, %p99
      %p101 = scmp.ne.s32.totalorder %s93, %s96
      %p102 = scmp.eq.s32.totalorder %s11, 0
      %p103 = por %p101, %p102
      %p104 = scmp.ne.s32.totalorder %s93, %s96
      %p105 = scmp.eq.s32.totalorder %s16, 3
      %p106 = por %p104, %p105
      %p107 = scmp.ne.s32.totalorder %s96, %s97
      %p108 = scmp.eq.s32.totalorder %s16, 0
      %p109 = por %p107, %p108
      %p110 = scmp.ne.s32.totalorder %s96, %s97
      %p111 = scmp.eq.s32.totalorder %s17, 3
      %p112 = por %p110, %p111
      %p114 = scmp.ne.s32.totalorder %s97, %s113
      %p115 = scmp.eq.s32.totalorder %s17, 0
      %p116 = por %p114, %p115
      %p117 = scmp.le.s32.totalorder 1, %s11
      %p118 = scmp.lt.s32.totalorder %s11, 5
      %p119 = pnand %p117, %p118
      %p120 = pneg %p119
      // Predicated region
      $region9: #{tpu_custom_call.1} parent=5 // pred_check
        _
      $region10: #{tpu_custom_call.1} parent=5 // pred_check_branch
        %122 = sbr.rel (%p119) target = $region12
      $region11: #{tpu_custom_call.1} parent=5 // pred_region
        %s123 = ssub.s32 %s11, 1
      $region12: #{tpu_custom_call.1} parent=5 // pred_fallthru
        _
      %p124 = scmp.lt.s32.totalorder %s11, 4
      // Predicated region
      $region13: #{tpu_custom_call.1} parent=5 // pred_check
        %p125 = pneg %p124
      $region14: #{tpu_custom_call.1} parent=5 // pred_check_branch
        %127 = sbr.rel (%p125) target = $region16
      $region15: #{tpu_custom_call.1} parent=5 // pred_region
        // Predicated region
        $region17: #{tpu_custom_call.1} parent=15 // pred_check
          %p128 = pneg %p47
        $region18: #{tpu_custom_call.1} parent=15 // pred_check_branch
          %130 = sbr.rel (%p128) target = $region20
        $region19: #{tpu_custom_call.1} parent=15 // pred_region
          %s131 = smul.u32 %s18, 2
          %s132 = sadd.s32 %s131, %s19
          %s133 = smul.u32 2, %s132
          %p134 = scmp.lt.s32.totalorder %s133, 7
          %s135 = scalar_select %p134, %s133, 7
          %s136 = smul.addr %s135, 8
          %s137 = scalar_lea.vmem %s0, %s136
          %s138 = smul.u32 %s18, 2
          %s139 = sadd.s32 %s138, %s19
          %s140 = smul.u32 2, %s139
        $region20: #{tpu_custom_call.1} parent=15 // pred_fallthru
          _
        // Predicated region
        $region21: #{tpu_custom_call.1} parent=15 // pred_check
          %p141 = pneg %p77
        $region22: #{tpu_custom_call.1} parent=15 // pred_check_branch
          %143 = sbr.rel (%p141) target = $region24
        $region23: #{tpu_custom_call.1} parent=15 // pred_region
          %s144 = smul.u32 %s18, 2
          %s145 = sadd.s32 %s144, %s19
          %s146 = smul.u32 2, %s145
          %p147 = scmp.lt.s32.totalorder %s146, 7
          %s148 = scalar_select %p147, %s146, 7
          %s149 = smul.addr %s148, 8
          %s150 = scalar_lea.vmem %s1, %s149
          %s151 = smul.u32 %s18, 2
          %s152 = sadd.s32 %s151, %s19
          %s153 = smul.u32 2, %s152
        $region24: #{tpu_custom_call.1} parent=15 // pred_fallthru
          _
      $region16: #{tpu_custom_call.1} parent=5 // pred_fallthru
        _
      %p154 = scmp.le.s32.totalorder 1, %s11
      %p155 = scmp.lt.s32.totalorder %s11, 5
      %p156 = pnand %p154, %p155
      %p157 = pneg %p156
      // Predicated region
      $region25: #{tpu_custom_call.1} parent=5 // pred_check
        _
      $region26: #{tpu_custom_call.1} parent=5 // pred_check_branch
        %159 = sbr.rel (%p156) target = $region28
      $region27: #{tpu_custom_call.1} parent=5 // pred_region
        %s160 = ssub.s32 %s11, 1
        %s161 = smul.u32 %s20, 2
        %s162 = sadd.s32 %s161, %s21
        %s163 = smul.u32 2, %s162
        %p164 = scmp.lt.s32.totalorder %s163, 7
        %s165 = scalar_select %p164, %s163, 7
        %s166 = smul.addr %s165, 8
        %s167 = scalar_lea.vmem %s0, %s166
        %p168 = pneg %p53
        %p169 = pneg %p50
        %s170 = smul.u32 %s20, 2
        %s171 = sadd.s32 %s170, %s21
        %s172 = smul.u32 2, %s171
        %p173 = scmp.lt.s32.totalorder %s172, 7
        %s174 = scalar_select %p173, %s172, 7
        %s175 = smul.addr %s174, 8
        %s176 = scalar_lea.vmem %s1, %s175
        %p177 = pneg %p83
        %p178 = pneg %p80
        %p179 = pneg %p109
        %p180 = pneg %p106
        %s181 = sand.u32 %s96, 1
        %s182 = scalar_lea.sflag [#allocation4], %s181
        %s183 = sand.u32 %s96, 1
        %s184 = smul.addr %s183, 8
        %s185 = scalar_lea.vmem [#allocation3], %s184
        %s186 = smul.u32 %s20, 2
        %s187 = sadd.s32 %s186, %s21
        %s188 = smul.u32 2, %s187
        %p189 = scmp.lt.s32.totalorder %s188, 7
        %s190 = scalar_select %p189, %s188, 7
        %s191 = smul.addr %s190, 8
        %s192 = scalar_lea.vmem %s0, %s191
        %s193 = smul.u32 %s20, 2
        %s194 = sadd.s32 %s193, %s21
        %s195 = smul.u32 2, %s194
        %s196 = smul.u32 %s20, 2
        %s197 = sadd.s32 %s196, %s21
        %s198 = smul.u32 2, %s197
        %p199 = scmp.lt.s32.totalorder %s198, 7
        %s200 = scalar_select %p199, %s198, 7
        %s201 = smul.addr %s200, 8
        %s202 = scalar_lea.vmem %s1, %s201
        %s203 = smul.u32 %s20, 2
        %s204 = sadd.s32 %s203, %s21
        %s205 = smul.u32 2, %s204
        %p206 = scmp.eq.s32.totalorder %s21, 0
        // Predicated region
        $region29: #{tpu_custom_call.1} parent=27 // pred_check
          %p207 = pneg %p206
        $region30: #{tpu_custom_call.1} parent=27 // pred_check_branch
          %209 = sbr.rel (%p207) target = $region32
        $region31: #{tpu_custom_call.1} parent=27 // pred_region
          %vm210 = vcmask 31744
          %211 = vst.msk [vmem:[#allocation2] sm:$0xff] %vm210, 0.0
          %212 = vst.msk [vmem:[#allocation2 + $0x8] sm:$0xff] %vm210, 0.0
        $region32: #{tpu_custom_call.1} parent=27 // pred_fallthru
          _
        %v213 = vld [vmem:[%s192] sm:$0xff]
        %v214 = vld [vmem:[%s192 + $0x8] sm:$0xff]
        %v215 = vld [vmem:[%s202] sm:$0xff]
        %v216 = vld [vmem:[%s202 + $0x8] sm:$0xff]
        %v217 = vlaneseq
        %v218 = vand.u32 %v217, 127
        %vm219 = vcmp.ge.s32.totalorder %v218, 0
        %vm220 = vcmp.lt.s32.totalorder %v218, 32
        %vm221 = vmand %vm219, %vm220
        %vm222 = vcmp.ge.s32.totalorder %v218, 32
        %vm223 = vcmp.lt.s32.totalorder %v218, 64
        %vm224 = vmand %vm222, %vm223
        %vm225 = vcmp.ge.s32.totalorder %v218, 64
        %vm226 = vcmp.lt.s32.totalorder %v218, 96
        %vm227 = vmand %vm225, %vm226
        %vm228 = vcmp.ge.s32.totalorder %v218, 96
        %vm229 = vcmp.lt.s32.totalorder %v218, 128
        %vm230 = vmand %vm228, %vm229
        %231 = vset.pattern.permute.xlu0 0
        %232 = vperm.xlu0 %231, %v215
        %v233 = vpop.permute.xlu0 %232
        %234 = vset.pattern.permute.xlu0 0
        %235 = vperm.xlu0 %234, %v216
        %v236 = vpop.permute.xlu0 %235
        %vm237 = vcmp.eq.s32.totalorder %v218, %v233
        %vm238 = vcmp.eq.s32.totalorder %v218, %v236
        %vm239 = vmand %vm221, %vm237
        %vm240 = vmand %vm221, %vm238
        %v241 = vadd.s32 %v215, 32
        %v242 = vadd.s32 %v216, 32
        %243 = vset.pattern.permute.xlu0 1
        %244 = vperm.xlu0 %243, %v241
        %v245 = vpop.permute.xlu0 %244
        %246 = vset.pattern.permute.xlu0 1
        %247 = vperm.xlu0 %246, %v242
        %v248 = vpop.permute.xlu0 %247
        %vm249 = vcmp.eq.s32.totalorder %v218, %v245
        %vm250 = vcmp.eq.s32.totalorder %v218, %v248
        %vm251 = vmand %vm224, %vm249
        %vm252 = vmand %vm224, %vm250
        %vm253 = vmor %vm239, %vm251
        %vm254 = vmor %vm240, %vm252
        %v255 = vadd.s32 %v215, 64
        %v256 = vadd.s32 %v216, 64
        %257 = vset.pattern.permute.xlu0 2
        %258 = vperm.xlu0 %257, %v255
        %v259 = vpop.permute.xlu0 %258
        %260 = vset.pattern.permute.xlu0 2
        %261 = vperm.xlu0 %260, %v256
        %v262 = vpop.permute.xlu0 %261
        %vm263 = vcmp.eq.s32.totalorder %v218, %v259
        %vm264 = vcmp.eq.s32.totalorder %v218, %v262
        %vm265 = vmand %vm227, %vm263
        %vm266 = vmand %vm227, %vm264
        %vm267 = vmor %vm253, %vm265
        %vm268 = vmor %vm254, %vm266
        %v269 = vadd.s32 %v215, 96
        %v270 = vadd.s32 %v216, 96
        %271 = vset.pattern.permute.xlu0 3
        %272 = vperm.xlu0 %271, %v269
        %v273 = vpop.permute.xlu0 %272
        %274 = vset.pattern.permute.xlu0 3
        %275 = vperm.xlu0 %274, %v270
        %v276 = vpop.permute.xlu0 %275
        %vm277 = vcmp.eq.s32.totalorder %v218, %v273
        %vm278 = vcmp.eq.s32.totalorder %v218, %v276
        %vm279 = vmand %vm230, %vm277
        %vm280 = vmand %vm230, %vm278
        %vm281 = vmor %vm267, %vm279
        %vm282 = vmor %vm268, %vm280
        %v283 = vsel %vm221, %v213, -inf
        %v284 = vsel %vm221, %v214, -inf
        %285 = vmax.xlane.f32.xlu0 %v283
        %v286 = vpop.xlane.xlu0 %285
        %287 = vmax.xlane.f32.xlu0 %v284
        %v288 = vpop.xlane.xlu0 %287
        %v289 = vsel %vm221, %v286, 0.0
        %v290 = vsel %vm221, %v288, 0.0
        %v291 = vsel %vm224, %v213, -inf
        %v292 = vsel %vm224, %v214, -inf
        %293 = vmax.xlane.f32.xlu0 %v291
        %v294 = vpop.xlane.xlu0 %293
        %295 = vmax.xlane.f32.xlu0 %v292
        %v296 = vpop.xlane.xlu0 %295
        %v297 = vsel %vm224, %v294, %v289
        %v298 = vsel %vm224, %v296, %v290
        %v299 = vsel %vm227, %v213, -inf
        %v300 = vsel %vm227, %v214, -inf
        %301 = vmax.xlane.f32.xlu0 %v299
        %v302 = vpop.xlane.xlu0 %301
        %303 = vmax.xlane.f32.xlu0 %v300
        %v304 = vpop.xlane.xlu0 %303
        %v305 = vsel %vm227, %v302, %v297
        %v306 = vsel %vm227, %v304, %v298
        %v307 = vsel %vm230, %v213, -inf
        %v308 = vsel %vm230, %v214, -inf
        %309 = vmax.xlane.f32.xlu0 %v307
        %v310 = vpop.xlane.xlu0 %309
        %311 = vmax.xlane.f32.xlu0 %v308
        %v312 = vpop.xlane.xlu0 %311
        %v313 = vsel %vm230, %v310, %v305
        %v314 = vsel %vm230, %v312, %v306
        %v315 = vsub.f32 %v213, %v313
        %v316 = vsub.f32 %v214, %v314
        %v317 = vmul.f32 %v315, 1.442695
        %v318 = vpow.pop %v317
        %v319 = vmul.f32 %v316, 1.442695
        %v320 = vpow.pop %v319
        %v321 = vsel %vm281, %v213, 0.0
        %v322 = vsel %vm282, %v214, 0.0
        %v323 = vsel %vm221, %v318, 0.0
        %v324 = vsel %vm221, %v320, 0.0
        %325 = vadd.xlane.f32.xlu0 %v323
        %v326 = vpop.xlane.xlu0 %325
        %327 = vadd.xlane.f32.xlu0 %v324
        %v328 = vpop.xlane.xlu0 %327
        %v329 = vsel %vm221, %v321, 0.0
        %v330 = vsel %vm221, %v322, 0.0
        %331 = vadd.xlane.f32.xlu0 %v329
        %v332 = vpop.xlane.xlu0 %331
        %333 = vadd.xlane.f32.xlu0 %v330
        %v334 = vpop.xlane.xlu0 %333
        %vm335 = vcmp.eq.s32.totalorder %v218, 0
        %v336 = vsel %vm335, %v286, 0.0
        %v337 = vsel %vm335, %v288, 0.0
        %v338 = vsel %vm335, %v326, 0.0
        %v339 = vsel %vm335, %v328, 0.0
        %v340 = vsel %vm335, %v332, 0.0
        %v341 = vsel %vm335, %v334, 0.0
        %v342 = vsel %vm224, %v318, 0.0
        %v343 = vsel %vm224, %v320, 0.0
        %344 = vadd.xlane.f32.xlu0 %v342
        %v345 = vpop.xlane.xlu0 %344
        %346 = vadd.xlane.f32.xlu0 %v343
        %v347 = vpop.xlane.xlu0 %346
        %v348 = vsel %vm224, %v321, 0.0
        %v349 = vsel %vm224, %v322, 0.0
        %350 = vadd.xlane.f32.xlu0 %v348
        %v351 = vpop.xlane.xlu0 %350
        %352 = vadd.xlane.f32.xlu0 %v349
        %v353 = vpop.xlane.xlu0 %352
        %vm354 = vcmp.eq.s32.totalorder %v218, 1
        %v355 = vsel %vm354, %v294, %v336
        %v356 = vsel %vm354, %v296, %v337
        %v357 = vsel %vm354, %v345, %v338
        %v358 = vsel %vm354, %v347, %v339
        %v359 = vsel %vm354, %v351, %v340
        %v360 = vsel %vm354, %v353, %v341
        %v361 = vsel %vm227, %v318, 0.0
        %v362 = vsel %vm227, %v320, 0.0
        %363 = vadd.xlane.f32.xlu0 %v361
        %v364 = vpop.xlane.xlu0 %363
        %365 = vadd.xlane.f32.xlu0 %v362
        %v366 = vpop.xlane.xlu0 %365
        %v367 = vsel %vm227, %v321, 0.0
        %v368 = vsel %vm227, %v322, 0.0
        %369 = vadd.xlane.f32.xlu0 %v367
        %v370 = vpop.xlane.xlu0 %369
        %371 = vadd.xlane.f32.xlu0 %v368
        %v372 = vpop.xlane.xlu0 %371
        %vm373 = vcmp.eq.s32.totalorder %v218, 2
        %v374 = vsel %vm373, %v302, %v355
        %v375 = vsel %vm373, %v304, %v356
        %v376 = vsel %vm373, %v364, %v357
        %v377 = vsel %vm373, %v366, %v358
        %v378 = vsel %vm373, %v370, %v359
        %v379 = vsel %vm373, %v372, %v360
        %v380 = vsel %vm230, %v318, 0.0
        %v381 = vsel %vm230, %v320, 0.0
        %382 = vadd.xlane.f32.xlu0 %v380
        %v383 = vpop.xlane.xlu0 %382
        %384 = vadd.xlane.f32.xlu0 %v381
        %v385 = vpop.xlane.xlu0 %384
        %v386 = vsel %vm230, %v321, 0.0
        %v387 = vsel %vm230, %v322, 0.0
        %388 = vadd.xlane.f32.xlu0 %v386
        %v389 = vpop.xlane.xlu0 %388
        %390 = vadd.xlane.f32.xlu0 %v387
        %v391 = vpop.xlane.xlu0 %390
        %vm392 = vcmp.eq.s32.totalorder %v218, 3
        %v393 = vsel %vm392, %v310, %v374
        %v394 = vsel %vm392, %v312, %v375
        %v395 = vsel %vm392, %v383, %v376
        %v396 = vsel %vm392, %v385, %v377
        %v397 = vsel %vm392, %v389, %v378
        %v398 = vsel %vm392, %v391, %v379
        %v399 = vlog2.pop %v395
        %v400 = vmul.f32 %v399, 0.6931472
        %v401 = vlog2.pop %v396
        %v402 = vmul.f32 %v401, 0.6931472
        %v403 = vadd.f32 %v393, %v400
        %v404 = vadd.f32 %v394, %v402
        %v405 = vsub.f32 %v403, %v397
        %v406 = vsub.f32 %v404, %v398
        %v407 = vsub.f32 0.0, %v405
        %v408 = vsub.f32 0.0, %v406
        %v409 = vmul.f32 %v407, 1.442695
        %v410 = vpow.pop %v409
        %v411 = vmul.f32 %v408, 1.442695
        %v412 = vpow.pop %v411
        %v413 = vsub.f32 1.0, %v410
        %v414 = vsub.f32 1.0, %v412
        %v415 = vmax.f32 %v413, 0.0
        %v416 = vmax.f32 %v414, 0.0
        %v417 = vmul.f32 %v415, %v415
        %v418 = vmul.f32 %v416, %v416
        %v419 = vmul.f32 %v417, %v405
        %v420 = vmul.f32 %v418, %v406
        %s421 = smul.u32 %s20, 2
        %s422 = sadd.s32 %s421, %s21
        %v423 = vlaneseq
        %v424 = vshrl.u32 %v423, 7
        %v425 = vadd.s32 %v424, 8
        %s426 = smul.u32 %s422, 16
        %v427 = vstv %s426
        %v428 = vadd.s32 %v427, %v424
        %v429 = vadd.s32 %v427, %v425
        %v430 = vmul.u32 %v428, 4
        %v431 = vmul.u32 %v429, 4
        %v432 = vadd.s32 %v430, %v218
        %v433 = vadd.s32 %v431, %v218
        %vm434 = vcmp.lt.s32.totalorder %v432, 250
        %vm435 = vcmp.lt.s32.totalorder %v433, 250
        %v436 = vsel %vm434, %v419, 0.0
        %v437 = vsel %vm435, %v420, 0.0
        %v438 = vld [vmem:[#allocation2] sm:$0xff]
        %v439 = vld [vmem:[#allocation2 + $0x8] sm:$0xff]
        %v440 = vadd.f32 %v438, %v436
        %v441 = vadd.f32 %v439, %v437
        %vm442 = vcmask 31744
        %443 = vst.msk [vmem:[#allocation2] sm:$0xff] %vm442, %v440
        %444 = vst.msk [vmem:[#allocation2 + $0x8] sm:$0xff] %vm442, %v441
        %p445 = scmp.eq.s32.totalorder %s21, 1
        // Predicated region
        $region33: #{tpu_custom_call.1} parent=27 // pred_check
          %p446 = pneg %p445
        $region34: #{tpu_custom_call.1} parent=27 // pred_check_branch
          %448 = sbr.rel (%p446) target = $region36
        $region35: #{tpu_custom_call.1} parent=27 // pred_region
          %v449 = vld [vmem:[#allocation2] sm:$0xff]
          %v450 = vld [vmem:[#allocation2 + $0x8] sm:$0xff]
          %v451 = vsel %vm442, %v449, 0.0
          %v452 = vsel %vm442, %v450, 0.0
          %v453 = vadd.f32 %v451, %v452
          %454 = vadd.xlane.f32.xlu0 %v453
          %v455 = vpop.xlane.xlu0 %454
          %v456 = vrot.slane %v455, 4
          %v457 = vadd.f32 %v455, %v456
          %v458 = vrot.slane %v457, 2
          %v459 = vadd.f32 %v457, %v458
          %v460 = vrot.slane %v459, 1
          %v461 = vadd.f32 %v459, %v460
          %s462 = vtos %v461
          %v463 = vstv %s462
          %464 = vst [vmem:[%s185] sm:$0xff] %v463
        $region36: #{tpu_custom_call.1} parent=27 // pred_fallthru
          _
        %s465 = sand.u32 %s96, 1
        %s466 = scalar_lea.sflag [#allocation4], %s465
        %s467 = sand.u32 %s96, 1
        %s468 = smul.addr %s467, 8
        %s469 = scalar_lea.vmem [#allocation3], %s468
        // Predicated region
        $region37: #{tpu_custom_call.1} parent=27 // pred_check
          %p470 = pneg %p106
        $region38: #{tpu_custom_call.1} parent=27 // pred_check_branch
          %472 = sbr.rel (%p470) target = $region40
        $region39: #{tpu_custom_call.1} parent=27 // pred_region
          %s474 = ssub.s32 128, 128
          %475 = vsyncadd %s466, %s474
          %s476 = smul.addr %s20, 128
          %s477 = scalar_lea.hbm %s2, %s476
          %s479 = sshll.u32 %s469, 4
          %s480 = int_to_ptr.vmem [resolvable:$true] %s479
          %482 = dma.vmem_to_hbm [thread:$0]  %s480, 128, %s477, %s466
        $region40: #{tpu_custom_call.1} parent=27 // pred_fallthru
          _
      $region28: #{tpu_custom_call.1} parent=5 // pred_fallthru
        _
      %p483 = scmp.le.s32.totalorder 2, %s11
      // Predicated region
      $region41: #{tpu_custom_call.1} parent=5 // pred_check
        %p484 = pneg %p483
      $region42: #{tpu_custom_call.1} parent=5 // pred_check_branch
        %486 = sbr.rel (%p484) target = $region44
      $region43: #{tpu_custom_call.1} parent=5 // pred_region
        %s487 = ssub.s32 %s11, 2
        // Predicated region
        $region45: #{tpu_custom_call.1} parent=43 // pred_check
          %p488 = pneg %p112
        $region46: #{tpu_custom_call.1} parent=43 // pred_check_branch
          %490 = sbr.rel (%p488) target = $region48
        $region47: #{tpu_custom_call.1} parent=43 // pred_region
          %s491 = sand.u32 %s97, 1
          %s492 = scalar_lea.sflag [#allocation4], %s491
          %s493 = sand.u32 %s97, 1
          %s494 = smul.addr %s493, 8
          %s495 = scalar_lea.vmem [#allocation3], %s494
          %496 = dma.done %s492, 128
        $region48: #{tpu_custom_call.1} parent=43 // pred_fallthru
          _
      $region44: #{tpu_custom_call.1} parent=5 // pred_fallthru
        _
    $region6: #{tpu_custom_call.1} parent=1 // loop_footer
      %s15 = sadd.s32 1, %s11
    $region7: #{tpu_custom_call.1} parent=1 // loop_footer_branch
      %10 = sbr.rel target = $region3
    $region8: #{tpu_custom_call.1} parent=1 // loop_exit
      _
    %497 = vsyncpa [#allocation4], 1
    %s498 = scalar_lea.sflag [#allocation4], 1
    %499 = vsyncpa %s498, 1

</llo_original>
